<compile_context>
chip_gen: v6e
topology: v6e:2x2x1
jax: 0.10.0
libtpu: 0.0.40
codegen_flags: <defaults>
</compile_context>

<pallas_src>
import functools

import jax
import jax.numpy as jnp
from jax import lax
from jax.experimental import pallas as pl
from jax.experimental.pallas import tpu as pltpu
import numpy as np

EPS = 1e-8


def _homography_warp_kernel(homo_ref, grid_ref, patch_ref, out_ref,
                            *, h_in, w_in, channels):
    b = pl.program_id(0)
    base = b * 9

    # 3x3 homography entries as scalars from flat SMEM.
    h00 = homo_ref[base + 0]; h01 = homo_ref[base + 1]; h02 = homo_ref[base + 2]
    h10 = homo_ref[base + 3]; h11 = homo_ref[base + 4]; h12 = homo_ref[base + 5]
    h20 = homo_ref[base + 6]; h21 = homo_ref[base + 7]; h22 = homo_ref[base + 8]

    g = grid_ref[0]                 # (2, TQ)  lane-dense
    gx = g[0:1, :]                  # (1, TQ)
    gy = g[1:2, :]                  # (1, TQ)
    img = patch_ref[0]              # (C*H_in, W_in)
    tq = gx.shape[-1]

    # transform_points: homogeneous transform + eps-guarded conversion.
    u = h00 * gx + h01 * gy + h02
    v = h10 * gx + h11 * gy + h12
    w = h20 * gx + h21 * gy + h22
    scale = jnp.where(jnp.abs(w) > EPS, 1.0 / w, jnp.ones_like(w))
    xd = u * scale                  # normalized x in [-1, 1]
    yd = v * scale                  # normalized y in [-1, 1]

    # grid_sample, mode='bilinear', padding_mode='zeros', align_corners=True.
    ix = (xd + 1.0) * 0.5 * (w_in - 1)
    iy = (yd + 1.0) * 0.5 * (h_in - 1)
    x0 = jnp.floor(ix); x1 = x0 + 1.0
    y0 = jnp.floor(iy); y1 = y0 + 1.0
    wx1 = ix - x0; wx0 = 1.0 - wx1
    wy1 = iy - y0; wy0 = 1.0 - wy1

    # Per-axis validity folded directly into the (separable) weights.
    swx0 = jnp.where((x0 >= 0.0) & (x0 <= w_in - 1.0), wx0, 0.0)   # (1, TQ)
    swx1 = jnp.where((x1 >= 0.0) & (x1 <= w_in - 1.0), wx1, 0.0)
    swy0 = jnp.where((y0 >= 0.0) & (y0 <= h_in - 1.0), wy0, 0.0)
    swy1 = jnp.where((y1 >= 0.0) & (y1 <= h_in - 1.0), wy1, 0.0)

    # Clipped integer indices (OOB corners already have zero weight above).
    xi0 = jnp.clip(x0, 0.0, w_in - 1.0).astype(jnp.int32)
    xi1 = jnp.clip(x1, 0.0, w_in - 1.0).astype(jnp.int32)
    yi0 = jnp.clip(y0, 0.0, h_in - 1.0).astype(jnp.int32)
    yi1 = jnp.clip(y1, 0.0, h_in - 1.0).astype(jnp.int32)

    # Separable one-hot interpolation matrices (tiny: W_in x TQ / H_in x TQ).
    w_iota = lax.broadcasted_iota(jnp.int32, (w_in, tq), 0)
    h_iota = lax.broadcasted_iota(jnp.int32, (h_in, tq), 0)
    sx = (jnp.where(w_iota == xi0, swx0, 0.0)
          + jnp.where(w_iota == xi1, swx1, 0.0))          # (W_in, TQ)
    sy = (jnp.where(h_iota == yi0, swy0, 0.0)
          + jnp.where(h_iota == yi1, swy1, 0.0))          # (H_in, TQ)

    # x-interpolation on the MXU: (C*H_in, W_in) @ (W_in, TQ) -> (C*H_in, TQ).
    t = jnp.dot(img, sx, preferred_element_type=jnp.float32)
    # y-interpolation on the VPU: weighted sum over the H_in rows per column.
    t = t.reshape(channels, h_in, tq)                     # layout-neutral split
    out = jnp.sum(t * sy[None, :, :], axis=1)             # (C, TQ)
    out_ref[0] = out.astype(out_ref.dtype)


def _pick_tq(q):
    """Largest lane-friendly divisor of Q, capped at 2048."""
    if q <= 2048:
        return q
    for cand in (2048, 1024, 512, 256, 128):
        if q % cand == 0:
            return cand
    return q  # TODO(synk): pad Q for odd output sizes instead of one big tile.


def homography_warp(patch, homo, gx, gy):
    """patch: (N,C,H,W) f32, homo: (N,3,3) f32, gx/gy: (N,H,W) f32 -> (N,C,H,W)."""
    N, C, H_in, W_in = patch.shape
    _, H_out, W_out = gx.shape
    Q = H_out * W_out
    TQ = _pick_tq(Q)

    # Lane-dense flattening done at the wrapper (outside the kernel).
    patch_flat = patch.reshape(N, C * H_in, W_in).astype(jnp.float32)        # (N, C*H, W)
    grid_flat = jnp.stack(
        [gx.reshape(N, Q), gy.reshape(N, Q)], axis=1).astype(jnp.float32)    # (N, 2, Q)
    homo_flat = homo.reshape(N * 9).astype(jnp.float32)                      # (N*9,)

    kernel = functools.partial(_homography_warp_kernel,
                               h_in=H_in, w_in=W_in, channels=C)

    out_flat = pl.pallas_call(
        kernel,
        out_shape=jax.ShapeDtypeStruct((N, C, Q), patch.dtype),
        grid_spec=pltpu.PrefetchScalarGridSpec(
            num_scalar_prefetch=0,
            grid=(N, Q // TQ),
            in_specs=[
                pl.BlockSpec(memory_space=pltpu.MemorySpace.SMEM),       # homo (N*9,)
                pl.BlockSpec((1, 2, TQ), lambda b, q: (b, 0, q)),        # grid tile
                pl.BlockSpec((1, C * H_in, W_in), lambda b, q: (b, 0, 0)),  # patch
            ],
            out_specs=pl.BlockSpec((1, C, TQ), lambda b, q: (b, 0, q)),
        ),
        compiler_params=pltpu.CompilerParams(
            dimension_semantics=("parallel", "parallel")),
    )(homo_flat, grid_flat, patch_flat)

    return out_flat.reshape(N, C, H_out, W_out)


def make_grid(x_min, y_min, x_max, y_max, height, width):
    """JAX port of create_batched_meshgrid, returned as gx, gy of (B, H, W)."""
    B = x_min.shape[0]
    xs = x_min[:, None] + (x_max - x_min)[:, None] / (width - 1) * jnp.arange(
        width, dtype=jnp.float32)[None, :]                      # (B, W)
    ys = y_min[:, None] + (y_max - y_min)[:, None] / (height - 1) * jnp.arange(
        height, dtype=jnp.float32)[None, :]                     # (B, H)
    gx = jnp.broadcast_to(xs[:, None, :], (B, height, width))   # grid[...,0]
    gy = jnp.broadcast_to(ys[:, :, None], (B, height, width))   # grid[...,1]
    return gx, gy


def reference_forward(patch, homo, gx, gy):
    """Pure-JAX reference of HomographyWarper.forward (bilinear, zeros, align_corners=True)."""
    N, C, H_in, W_in = patch.shape
    pts = jnp.stack([gx, gy, jnp.ones_like(gx)], axis=-1)          # (N,H,W,3)
    t = jnp.einsum('nij,nhwj->nhwi', homo, pts)
    z = t[..., 2:3]
    scale = jnp.where(jnp.abs(z) > EPS, 1.0 / z, jnp.ones_like(z))
    xy = t[..., :2] * scale
    ix = (xy[..., 0] + 1.0) * 0.5 * (W_in - 1)
    iy = (xy[..., 1] + 1.0) * 0.5 * (H_in - 1)
    x0 = jnp.floor(ix); x1 = x0 + 1.0
    y0 = jnp.floor(iy); y1 = y0 + 1.0
    wx1 = ix - x0; wx0 = 1.0 - wx1
    wy1 = iy - y0; wy0 = 1.0 - wy1
    flat = patch.reshape(N, C, H_in * W_in)

    def gather(xc, yc):
        valid = (xc >= 0.0) & (xc <= W_in - 1.0) & (yc >= 0.0) & (yc <= H_in - 1.0)
        xi = jnp.clip(xc, 0.0, W_in - 1.0).astype(jnp.int32)
        yi = jnp.clip(yc, 0.0, H_in - 1.0).astype(jnp.int32)
        idx = (yi * W_in + xi).reshape(N, 1, -1)                   # (N,1,Q)
        vals = jnp.take_along_axis(flat, jnp.broadcast_to(idx, (N, C, idx.shape[-1])), axis=2)
        vals = vals.reshape(N, C, *xc.shape[1:])
        return vals * valid[:, None].astype(vals.dtype)

    out = (gather(x0, y0) * (wx0 * wy0)[:, None]
           + gather(x1, y0) * (wx1 * wy0)[:, None]
           + gather(x0, y1) * (wx0 * wy1)[:, None]
           + gather(x1, y1) * (wx1 * wy1)[:, None])
    return out


if __name__ == "__main__":
    key = jax.random.PRNGKey(0)
    k1, k2, k3, k4, k5, k6 = jax.random.split(key, 6)

    N, C, H, W = 2, 4, 16, 16

    # "__init__" parameters (deterministic, in-script): per-batch grid extents.
    x_min = -1.0 + 0.1 * jax.random.normal(k1, (N,), jnp.float32)
    x_max = 1.0 + 0.1 * jax.random.normal(k2, (N,), jnp.float32)
    y_min = -1.0 + 0.1 * jax.random.normal(k3, (N,), jnp.float32)
    y_max = 1.0 + 0.1 * jax.random.normal(k4, (N,), jnp.float32)
    gx, gy = make_grid(x_min, y_min, x_max, y_max, H, W)

    # Forward inputs: image patch and homographies (identity + small perturbation).
    patch = jax.random.normal(k5, (N, C, H, W), jnp.float32)
    homo = (jnp.broadcast_to(jnp.eye(3, dtype=jnp.float32), (N, 3, 3))
            + 0.05 * jax.random.normal(k6, (N, 3, 3), jnp.float32))

    out = homography_warp(patch, homo, gx, gy)
    out = jax.block_until_ready(out)

    ref = jax.block_until_ready(reference_forward(patch, homo, gx, gy))
    np.testing.assert_allclose(np.asarray(out), np.asarray(ref), rtol=2e-3, atol=2e-3)

    print("KERNEL_OK")
</pallas_src>

<mosaic_0001>
module attributes {stable_mosaic.version = 11 : i64} {
  func.func @_homography_warp_kernel(%arg0: i32, %arg1: i32, %arg2: memref<18xf32, #tpu.memory_space<smem>>, %arg3: memref<1x2x256xf32, #tpu.memory_space<vmem>>, %arg4: memref<1x64x16xf32, #tpu.memory_space<vmem>>, %arg5: memref<1x4x256xf32, #tpu.memory_space<vmem>>) attributes {dimension_semantics = [#tpu.dimension_semantics<parallel>, #tpu.dimension_semantics<parallel>], iteration_bounds = array<i64: 2, 1>, scalar_prefetch = 0 : i64, scratch_operands = 0 : i64, tpu.core_type = #tpu.core_type<tc>, window_params = [{transform_indices = @transform_0, window_bounds = array<i64: 18>}, {transform_indices = @transform_1, window_bounds = array<i64: 1, 2, 256>}, {transform_indices = @transform_2, window_bounds = array<i64: 1, 64, 16>}, {transform_indices = @transform_3, window_bounds = array<i64: 1, 4, 256>}]} {
    %c9_i32 = arith.constant 9 : i32
    %0 = arith.muli %arg0, %c9_i32 : i32
    %c0_i32 = arith.constant 0 : i32
    %1 = arith.addi %0, %c0_i32 : i32
    %2 = arith.index_cast %1 : i32 to index
    %3 = memref.load %arg2[%2] : memref<18xf32, #tpu.memory_space<smem>>
    %c1_i32 = arith.constant 1 : i32
    %4 = arith.addi %0, %c1_i32 : i32
    %5 = arith.index_cast %4 : i32 to index
    %6 = memref.load %arg2[%5] : memref<18xf32, #tpu.memory_space<smem>>
    %c2_i32 = arith.constant 2 : i32
    %7 = arith.addi %0, %c2_i32 : i32
    %8 = arith.index_cast %7 : i32 to index
    %9 = memref.load %arg2[%8] : memref<18xf32, #tpu.memory_space<smem>>
    %c3_i32 = arith.constant 3 : i32
    %10 = arith.addi %0, %c3_i32 : i32
    %11 = arith.index_cast %10 : i32 to index
    %12 = memref.load %arg2[%11] : memref<18xf32, #tpu.memory_space<smem>>
    %c4_i32 = arith.constant 4 : i32
    %13 = arith.addi %0, %c4_i32 : i32
    %14 = arith.index_cast %13 : i32 to index
    %15 = memref.load %arg2[%14] : memref<18xf32, #tpu.memory_space<smem>>
    %c5_i32 = arith.constant 5 : i32
    %16 = arith.addi %0, %c5_i32 : i32
    %17 = arith.index_cast %16 : i32 to index
    %18 = memref.load %arg2[%17] : memref<18xf32, #tpu.memory_space<smem>>
    %c6_i32 = arith.constant 6 : i32
    %19 = arith.addi %0, %c6_i32 : i32
    %20 = arith.index_cast %19 : i32 to index
    %21 = memref.load %arg2[%20] : memref<18xf32, #tpu.memory_space<smem>>
    %c7_i32 = arith.constant 7 : i32
    %22 = arith.addi %0, %c7_i32 : i32
    %23 = arith.index_cast %22 : i32 to index
    %24 = memref.load %arg2[%23] : memref<18xf32, #tpu.memory_space<smem>>
    %c8_i32 = arith.constant 8 : i32
    %25 = arith.addi %0, %c8_i32 : i32
    %26 = arith.index_cast %25 : i32 to index
    %27 = memref.load %arg2[%26] : memref<18xf32, #tpu.memory_space<smem>>
    %c0 = arith.constant 0 : index
    %c0_0 = arith.constant 0 : index
    %c0_1 = arith.constant 0 : index
    %28 = vector.load %arg3[%c0, %c0_0, %c0_1] : memref<1x2x256xf32, #tpu.memory_space<vmem>>, vector<1x2x256xf32>
    %29 = vector.shape_cast %28 : vector<1x2x256xf32> to vector<2x256xf32>
    %30 = vector.extract_strided_slice %29 {offsets = [0, 0], sizes = [1, 256], strides = [1, 1]} : vector<2x256xf32> to vector<1x256xf32>
    %31 = vector.extract_strided_slice %29 {offsets = [1, 0], sizes = [1, 256], strides = [1, 1]} : vector<2x256xf32> to vector<1x256xf32>
    %c0_2 = arith.constant 0 : index
    %c0_3 = arith.constant 0 : index
    %c0_4 = arith.constant 0 : index
    %32 = vector.load %arg4[%c0_2, %c0_3, %c0_4] : memref<1x64x16xf32, #tpu.memory_space<vmem>>, vector<1x64x16xf32>
    %33 = vector.shape_cast %32 : vector<1x64x16xf32> to vector<64x16xf32>
    %34 = vector.broadcast %3 : f32 to vector<1x256xf32>
    %35 = arith.mulf %34, %30 : vector<1x256xf32>
    %36 = vector.broadcast %6 : f32 to vector<1x256xf32>
    %37 = arith.mulf %36, %31 : vector<1x256xf32>
    %38 = arith.addf %35, %37 : vector<1x256xf32>
    %39 = vector.broadcast %9 : f32 to vector<1x256xf32>
    %40 = arith.addf %38, %39 : vector<1x256xf32>
    %41 = vector.broadcast %12 : f32 to vector<1x256xf32>
    %42 = arith.mulf %41, %30 : vector<1x256xf32>
    %43 = vector.broadcast %15 : f32 to vector<1x256xf32>
    %44 = arith.mulf %43, %31 : vector<1x256xf32>
    %45 = arith.addf %42, %44 : vector<1x256xf32>
    %46 = vector.broadcast %18 : f32 to vector<1x256xf32>
    %47 = arith.addf %45, %46 : vector<1x256xf32>
    %48 = vector.broadcast %21 : f32 to vector<1x256xf32>
    %49 = arith.mulf %48, %30 : vector<1x256xf32>
    %50 = vector.broadcast %24 : f32 to vector<1x256xf32>
    %51 = arith.mulf %50, %31 : vector<1x256xf32>
    %52 = arith.addf %49, %51 : vector<1x256xf32>
    %53 = vector.broadcast %27 : f32 to vector<1x256xf32>
    %54 = arith.addf %52, %53 : vector<1x256xf32>
    %55 = math.absf %54 : vector<1x256xf32>
    %cst = arith.constant 9.99999993E-9 : f32
    %56 = vector.broadcast %cst : f32 to vector<1x256xf32>
    %57 = arith.cmpf ogt, %55, %56 : vector<1x256xf32>
    %cst_5 = arith.constant 1.000000e+00 : f32
    %58 = vector.broadcast %cst_5 : f32 to vector<1x256xf32>
    %59 = arith.divf %58, %54 : vector<1x256xf32>
    %cst_6 = arith.constant 1.000000e+00 : f32
    %60 = vector.broadcast %cst_6 : f32 to vector<1x256xf32>
    %61 = arith.select %57, %59, %60 : vector<1x256xi1>, vector<1x256xf32>
    %62 = arith.mulf %40, %61 : vector<1x256xf32>
    %63 = arith.mulf %47, %61 : vector<1x256xf32>
    %cst_7 = arith.constant 1.000000e+00 : f32
    %64 = vector.broadcast %cst_7 : f32 to vector<1x256xf32>
    %65 = arith.addf %62, %64 : vector<1x256xf32>
    %cst_8 = arith.constant 5.000000e-01 : f32
    %66 = vector.broadcast %cst_8 : f32 to vector<1x256xf32>
    %67 = arith.mulf %65, %66 : vector<1x256xf32>
    %cst_9 = arith.constant 1.500000e+01 : f32
    %68 = vector.broadcast %cst_9 : f32 to vector<1x256xf32>
    %69 = arith.mulf %67, %68 : vector<1x256xf32>
    %cst_10 = arith.constant 1.000000e+00 : f32
    %70 = vector.broadcast %cst_10 : f32 to vector<1x256xf32>
    %71 = arith.addf %63, %70 : vector<1x256xf32>
    %cst_11 = arith.constant 5.000000e-01 : f32
    %72 = vector.broadcast %cst_11 : f32 to vector<1x256xf32>
    %73 = arith.mulf %71, %72 : vector<1x256xf32>
    %cst_12 = arith.constant 1.500000e+01 : f32
    %74 = vector.broadcast %cst_12 : f32 to vector<1x256xf32>
    %75 = arith.mulf %73, %74 : vector<1x256xf32>
    %76 = math.floor %69 : vector<1x256xf32>
    %cst_13 = arith.constant 1.000000e+00 : f32
    %77 = vector.broadcast %cst_13 : f32 to vector<1x256xf32>
    %78 = arith.addf %76, %77 : vector<1x256xf32>
    %79 = math.floor %75 : vector<1x256xf32>
    %cst_14 = arith.constant 1.000000e+00 : f32
    %80 = vector.broadcast %cst_14 : f32 to vector<1x256xf32>
    %81 = arith.addf %79, %80 : vector<1x256xf32>
    %82 = arith.subf %69, %76 : vector<1x256xf32>
    %cst_15 = arith.constant 1.000000e+00 : f32
    %83 = vector.broadcast %cst_15 : f32 to vector<1x256xf32>
    %84 = arith.subf %83, %82 : vector<1x256xf32>
    %85 = arith.subf %75, %79 : vector<1x256xf32>
    %cst_16 = arith.constant 1.000000e+00 : f32
    %86 = vector.broadcast %cst_16 : f32 to vector<1x256xf32>
    %87 = arith.subf %86, %85 : vector<1x256xf32>
    %cst_17 = arith.constant 0.000000e+00 : f32
    %88 = vector.broadcast %cst_17 : f32 to vector<1x256xf32>
    %89 = arith.cmpf oge, %76, %88 : vector<1x256xf32>
    %cst_18 = arith.constant 1.500000e+01 : f32
    %90 = vector.broadcast %cst_18 : f32 to vector<1x256xf32>
    %91 = arith.cmpf ole, %76, %90 : vector<1x256xf32>
    %92 = arith.andi %89, %91 : vector<1x256xi1>
    %cst_19 = arith.constant 0.000000e+00 : f32
    %93 = vector.broadcast %cst_19 : f32 to vector<1x256xf32>
    %94 = arith.select %92, %84, %93 : vector<1x256xi1>, vector<1x256xf32>
    %cst_20 = arith.constant 0.000000e+00 : f32
    %95 = vector.broadcast %cst_20 : f32 to vector<1x256xf32>
    %96 = arith.cmpf oge, %78, %95 : vector<1x256xf32>
    %cst_21 = arith.constant 1.500000e+01 : f32
    %97 = vector.broadcast %cst_21 : f32 to vector<1x256xf32>
    %98 = arith.cmpf ole, %78, %97 : vector<1x256xf32>
    %99 = arith.andi %96, %98 : vector<1x256xi1>
    %cst_22 = arith.constant 0.000000e+00 : f32
    %100 = vector.broadcast %cst_22 : f32 to vector<1x256xf32>
    %101 = arith.select %99, %82, %100 : vector<1x256xi1>, vector<1x256xf32>
    %cst_23 = arith.constant 0.000000e+00 : f32
    %102 = vector.broadcast %cst_23 : f32 to vector<1x256xf32>
    %103 = arith.cmpf oge, %79, %102 : vector<1x256xf32>
    %cst_24 = arith.constant 1.500000e+01 : f32
    %104 = vector.broadcast %cst_24 : f32 to vector<1x256xf32>
    %105 = arith.cmpf ole, %79, %104 : vector<1x256xf32>
    %106 = arith.andi %103, %105 : vector<1x256xi1>
    %cst_25 = arith.constant 0.000000e+00 : f32
    %107 = vector.broadcast %cst_25 : f32 to vector<1x256xf32>
    %108 = arith.select %106, %87, %107 : vector<1x256xi1>, vector<1x256xf32>
    %cst_26 = arith.constant 0.000000e+00 : f32
    %109 = vector.broadcast %cst_26 : f32 to vector<1x256xf32>
    %110 = arith.cmpf oge, %81, %109 : vector<1x256xf32>
    %cst_27 = arith.constant 1.500000e+01 : f32
    %111 = vector.broadcast %cst_27 : f32 to vector<1x256xf32>
    %112 = arith.cmpf ole, %81, %111 : vector<1x256xf32>
    %113 = arith.andi %110, %112 : vector<1x256xi1>
    %cst_28 = arith.constant 0.000000e+00 : f32
    %114 = vector.broadcast %cst_28 : f32 to vector<1x256xf32>
    %115 = arith.select %113, %85, %114 : vector<1x256xi1>, vector<1x256xf32>
    %cst_29 = arith.constant 0.000000e+00 : f32
    %cst_30 = arith.constant 1.500000e+01 : f32
    %116 = vector.broadcast %cst_29 : f32 to vector<1x256xf32>
    %117 = arith.maximumf %116, %76 : vector<1x256xf32>
    %118 = vector.broadcast %cst_30 : f32 to vector<1x256xf32>
    %119 = arith.minimumf %118, %117 : vector<1x256xf32>
    %120 = arith.fptosi %119 : vector<1x256xf32> to vector<1x256xi32>
    %cst_31 = arith.constant 0.000000e+00 : f32
    %cst_32 = arith.constant 1.500000e+01 : f32
    %121 = vector.broadcast %cst_31 : f32 to vector<1x256xf32>
    %122 = arith.maximumf %121, %78 : vector<1x256xf32>
    %123 = vector.broadcast %cst_32 : f32 to vector<1x256xf32>
    %124 = arith.minimumf %123, %122 : vector<1x256xf32>
    %125 = arith.fptosi %124 : vector<1x256xf32> to vector<1x256xi32>
    %cst_33 = arith.constant 0.000000e+00 : f32
    %cst_34 = arith.constant 1.500000e+01 : f32
    %126 = vector.broadcast %cst_33 : f32 to vector<1x256xf32>
    %127 = arith.maximumf %126, %79 : vector<1x256xf32>
    %128 = vector.broadcast %cst_34 : f32 to vector<1x256xf32>
    %129 = arith.minimumf %128, %127 : vector<1x256xf32>
    %130 = arith.fptosi %129 : vector<1x256xf32> to vector<1x256xi32>
    %cst_35 = arith.constant 0.000000e+00 : f32
    %cst_36 = arith.constant 1.500000e+01 : f32
    %131 = vector.broadcast %cst_35 : f32 to vector<1x256xf32>
    %132 = arith.maximumf %131, %81 : vector<1x256xf32>
    %133 = vector.broadcast %cst_36 : f32 to vector<1x256xf32>
    %134 = arith.minimumf %133, %132 : vector<1x256xf32>
    %135 = arith.fptosi %134 : vector<1x256xf32> to vector<1x256xi32>
    %136 = tpu.iota {dimensions = array<i32: 0>} : vector<16x256xi32>
    %137 = tpu.iota {dimensions = array<i32: 0>} : vector<16x256xi32>
    %138 = vector.broadcast %120 : vector<1x256xi32> to vector<16x256xi32>
    %139 = arith.cmpi eq, %136, %138 : vector<16x256xi32>
    %cst_37 = arith.constant 0.000000e+00 : f32
    %140 = vector.shape_cast %94 : vector<1x256xf32> to vector<1x256xf32>
    %141 = vector.broadcast %140 : vector<1x256xf32> to vector<16x256xf32>
    %142 = vector.broadcast %cst_37 : f32 to vector<16x256xf32>
    %143 = arith.select %139, %141, %142 : vector<16x256xi1>, vector<16x256xf32>
    %144 = vector.broadcast %125 : vector<1x256xi32> to vector<16x256xi32>
    %145 = arith.cmpi eq, %136, %144 : vector<16x256xi32>
    %cst_38 = arith.constant 0.000000e+00 : f32
    %146 = vector.shape_cast %101 : vector<1x256xf32> to vector<1x256xf32>
    %147 = vector.broadcast %146 : vector<1x256xf32> to vector<16x256xf32>
    %148 = vector.broadcast %cst_38 : f32 to vector<16x256xf32>
    %149 = arith.select %145, %147, %148 : vector<16x256xi1>, vector<16x256xf32>
    %150 = arith.addf %143, %149 : vector<16x256xf32>
    %151 = vector.broadcast %130 : vector<1x256xi32> to vector<16x256xi32>
    %152 = arith.cmpi eq, %137, %151 : vector<16x256xi32>
    %cst_39 = arith.constant 0.000000e+00 : f32
    %153 = vector.shape_cast %108 : vector<1x256xf32> to vector<1x256xf32>
    %154 = vector.broadcast %153 : vector<1x256xf32> to vector<16x256xf32>
    %155 = vector.broadcast %cst_39 : f32 to vector<16x256xf32>
    %156 = arith.select %152, %154, %155 : vector<16x256xi1>, vector<16x256xf32>
    %157 = vector.broadcast %135 : vector<1x256xi32> to vector<16x256xi32>
    %158 = arith.cmpi eq, %137, %157 : vector<16x256xi32>
    %cst_40 = arith.constant 0.000000e+00 : f32
    %159 = vector.shape_cast %115 : vector<1x256xf32> to vector<1x256xf32>
    %160 = vector.broadcast %159 : vector<1x256xf32> to vector<16x256xf32>
    %161 = vector.broadcast %cst_40 : f32 to vector<16x256xf32>
    %162 = arith.select %158, %160, %161 : vector<16x256xi1>, vector<16x256xf32>
    %163 = arith.addf %156, %162 : vector<16x256xf32>
    %cst_41 = arith.constant dense<0.000000e+00> : vector<64x256xf32>
    %164 = tpu.matmul %33, %150, %cst_41 {dimension_numbers = #tpu.dot_dimension_numbers<[1], [0], [0], [1], [0, 0, 1, 1], [], []>} : vector<64x16xf32>, vector<16x256xf32>, vector<64x256xf32> -> vector<64x256xf32>
    %165 = vector.shape_cast %164 : vector<64x256xf32> to vector<4x16x256xf32>
    %166 = vector.shape_cast %163 : vector<16x256xf32> to vector<1x16x256xf32>
    %167 = vector.broadcast %166 : vector<1x16x256xf32> to vector<4x16x256xf32>
    %168 = arith.mulf %165, %167 : vector<4x16x256xf32>
    %cst_42 = arith.constant dense<0.000000e+00> : vector<4x256xf32>
    %169 = vector.multi_reduction <add>, %168, %cst_42 [1] : vector<4x16x256xf32> to vector<4x256xf32>
    %c0_43 = arith.constant 0 : index
    %c0_44 = arith.constant 0 : index
    %c0_45 = arith.constant 0 : index
    %170 = vector.load %arg5[%c0_43, %c0_44, %c0_45] : memref<1x4x256xf32, #tpu.memory_space<vmem>>, vector<1x4x256xf32>
    %171 = vector.shape_cast %170 : vector<1x4x256xf32> to vector<4x256xf32>
    %172 = vector.shape_cast %169 : vector<4x256xf32> to vector<1x4x256xf32>
    tpu.vector_store %arg5[%c0_43, %c0_44, %c0_45], %172 {strides = array<i32>} : memref<1x4x256xf32, #tpu.memory_space<vmem>>, vector<1x4x256xf32>,
    return
  }
  func.func @transform_0(%arg0: i32, %arg1: i32) -> i32 {
    %c0_i32 = arith.constant 0 : i32
    %c0_i32_0 = arith.constant 0 : i32
    return %c0_i32 : i32
  }
  func.func @transform_1(%arg0: i32, %arg1: i32) -> (i32, i32, i32) {
    %c0_i32 = arith.constant 0 : i32
    %c0_i32_0 = arith.constant 0 : i32
    return %arg0, %c0_i32, %arg1 : i32, i32, i32
  }
  func.func @transform_2(%arg0: i32, %arg1: i32) -> (i32, i32, i32) {
    %c0_i32 = arith.constant 0 : i32
    %c0_i32_0 = arith.constant 0 : i32
    %c0_i32_1 = arith.constant 0 : i32
    return %arg0, %c0_i32, %c0_i32_0 : i32, i32, i32
  }
  func.func @transform_3(%arg0: i32, %arg1: i32) -> (i32, i32, i32) {
    %c0_i32 = arith.constant 0 : i32
    %c0_i32_0 = arith.constant 0 : i32
    return %arg0, %c0_i32, %arg1 : i32, i32, i32
  }
}

</mosaic_0001>

<llo_original>
// kernel: tpu_custom_call.1
$region0: #{tpu_custom_call.1}
  #allocation0 [shape = 'u32[]', space=smem, size = 0x4, offset = 0x4, fixed_abs, tag = 'smem constant byte address 0x4 - core index']
  #allocation1 [shape = 'u32[144,128]{1,0:T(1,128)}', space=vmem, size = 0x12000, scoped, tag = 'internal scratch']
  %s0 = inlined_call_operand.vmem [shape: f32[18], index: 0, kind: input, shape index: {}]
  %s1 = inlined_call_operand.vmem [shape: f32[2,2,256], index: 1, kind: input, shape index: {}]
  %s2 = inlined_call_operand.vmem [shape: f32[2,64,16], index: 2, kind: input, shape index: {}]
  %s3 = inlined_call_operand.hbm [shape: f32[2,4,256], index: 3, kind: output, shape index: {}]
  %s4 = sld [smem:[#allocation0]]
  $region49: #{tpu_custom_call.1} parent=0
    _
  %s6 = ssub.s32 1, %s4
  %s7 = scalar_select 0, %s6, %s4
  $region1: #{tpu_custom_call.1} parent=0
    #allocation2 [shape = 'u8[512]{0}', space=smem, size = 0x200, scoped, tag = 'input window, operand 0, single buffered']
    #allocation3 [shape = 's32[2]{0}', space=sflag, size = 0x8, scoped, tag = 'scoped memory for tpu_custom_call.1']
    #allocation4 [shape = 's32[2]{0}', space=sflag, size = 0x8, scoped, tag = 'scoped memory for tpu_custom_call.1']
    #allocation5 [shape = 'u8[8192]{0}', space=vmem, size = 0x2000, scoped, tag = 'output window, operand 0']
    %8 = vsyncpa [#allocation4], 0
    %9 = vsyncpa [#allocation3], 0
    %s10 = scalar_lea.sflag [#allocation3], 1
    %11 = vsyncpa %s10, 0
    loop: start=0, step=1, limit=4
    $region2: #{tpu_custom_call.1} parent=1 // loop_pre_header
      _
    $region3: #{tpu_custom_call.1} parent=1 // loop_header
      %s13 = sphi 0, %s17
      %p14 = scmp.ge.s32.totalorder %s13, 4
      %s20 = sphi 0, %s32
      %s21 = sphi 0, %s28
      %s22 = sphi 0, %s20
      %s23 = sphi 0, %s21
      %s24 = sphi 0, %s22
      %s25 = sphi 0, %s23
      %s33 = sphi 0, %s33
      %s35 = sphi 0, %s33
      %s36 = sphi 0, %s35
      %s50 = sphi 0, %s36
      %s58 = sphi 0, %s60
      %s61 = sphi 0, %s58
      %s62 = sphi 0, %s61
      %s78 = sphi 0, %s62
      %s84 = sphi 0, %s86
      %s87 = sphi 0, %s84
      %s88 = sphi 0, %s87
      %s104 = sphi 0, %s88
      %s112 = sphi 0, %s114
      %s115 = sphi 0, %s112
      %s116 = sphi 0, %s115
      %s132 = sphi 0, %s116
    $region4: #{tpu_custom_call.1} parent=1 // loop_header_branch
      %16 = sbr.rel (%p14) target = $region8
    $region5: #{tpu_custom_call.1} parent=1 // loop_body
      %s18 = ssub.s32 %s13, 1
      %s19 = ssub.s32 %s13, 2
      %s26 = sadd.s32 1, %s21
      %p27 = scmp.ge.s32.totalorder %s26, 1
      %s28 = scalar_select %p27, 0, %s26
      %s29 = sadd.s32 1, %s20
      %s30 = scalar_select %p27, %s29, %s20
      %p31 = scmp.ge.s32.totalorder %s30, 2
      %s32 = scalar_select %p31, 0, %s30
      %s34 = sadd.s32 %s33, 1
      %p37 = scmp.eq.s32.totalorder %s13, 1
      %p38 = scmp.ne.s32.totalorder %s33, %s35
      %p39 = scmp.eq.s32.totalorder %s13, 0
      %p40 = por %p38, %p39
      %p41 = scmp.ne.s32.totalorder %s33, %s35
      %p42 = scmp.eq.s32.totalorder %s18, 1
      %p43 = por %p41, %p42
      %p44 = scmp.ne.s32.totalorder %s35, %s36
      %p45 = scmp.eq.s32.totalorder %s18, 0
      %p46 = por %p44, %p45
      %p47 = scmp.ne.s32.totalorder %s35, %s36
      %p48 = scmp.eq.s32.totalorder %s19, 1
      %p49 = por %p47, %p48
      %p51 = scmp.ne.s32.totalorder %s36, %s50
      %p52 = scmp.eq.s32.totalorder %s19, 0
      %p53 = por %p51, %p52
      %s54 = ssub.s32 %s20, %s32
      %s55 = ssub.s32 %s21, %s28
      %s56 = sor.u32 %s54, %s55
      %p57 = scmp.eq.s32.totalorder %s56, 0
      %s59 = sadd.s32 %s58, 1
      %s60 = scalar_select %p57, %s58, %s59
      %p63 = pneg %p57
      %p64 = scmp.eq.s32.totalorder %s13, 1
      %p65 = por %p63, %p64
      %p66 = scmp.ne.s32.totalorder %s58, %s61
      %p67 = scmp.eq.s32.totalorder %s13, 0
      %p68 = por %p66, %p67
      %p69 = scmp.ne.s32.totalorder %s58, %s61
      %p70 = scmp.eq.s32.totalorder %s18, 1
      %p71 = por %p69, %p70
      %p72 = scmp.ne.s32.totalorder %s61, %s62
      %p73 = scmp.eq.s32.totalorder %s18, 0
      %p74 = por %p72, %p73
      %p75 = scmp.ne.s32.totalorder %s61, %s62
      %p76 = scmp.eq.s32.totalorder %s19, 1
      %p77 = por %p75, %p76
      %p79 = scmp.ne.s32.totalorder %s62, %s78
      %p80 = scmp.eq.s32.totalorder %s19, 0
      %p81 = por %p79, %p80
      %s82 = ssub.s32 %s20, %s32
      %p83 = scmp.eq.s32.totalorder %s82, 0
      %s85 = sadd.s32 %s84, 1
      %s86 = scalar_select %p83, %s84, %s85
      %p89 = pneg %p83
      %p90 = scmp.eq.s32.totalorder %s13, 1
      %p91 = por %p89, %p90
      %p92 = scmp.ne.s32.totalorder %s84, %s87
      %p93 = scmp.eq.s32.totalorder %s13, 0
      %p94 = por %p92, %p93
      %p95 = scmp.ne.s32.totalorder %s84, %s87
      %p96 = scmp.eq.s32.totalorder %s18, 1
      %p97 = por %p95, %p96
      %p98 = scmp.ne.s32.totalorder %s87, %s88
      %p99 = scmp.eq.s32.totalorder %s18, 0
      %p100 = por %p98, %p99
      %p101 = scmp.ne.s32.totalorder %s87, %s88
      %p102 = scmp.eq.s32.totalorder %s19, 1
      %p103 = por %p101, %p102
      %p105 = scmp.ne.s32.totalorder %s88, %s104
      %p106 = scmp.eq.s32.totalorder %s19, 0
      %p107 = por %p105, %p106
      %s108 = ssub.s32 %s20, %s32
      %s109 = ssub.s32 %s21, %s28
      %s110 = sor.u32 %s108, %s109
      %p111 = scmp.eq.s32.totalorder %s110, 0
      %s113 = sadd.s32 %s112, 1
      %s114 = scalar_select %p111, %s112, %s113
      %p117 = pneg %p111
      %p118 = scmp.eq.s32.totalorder %s13, 1
      %p119 = por %p117, %p118
      %p120 = scmp.ne.s32.totalorder %s112, %s115
      %p121 = scmp.eq.s32.totalorder %s13, 0
      %p122 = por %p120, %p121
      %p123 = scmp.ne.s32.totalorder %s112, %s115
      %p124 = scmp.eq.s32.totalorder %s18, 1
      %p125 = por %p123, %p124
      %p126 = scmp.ne.s32.totalorder %s115, %s116
      %p127 = scmp.eq.s32.totalorder %s18, 0
      %p128 = por %p126, %p127
      %p129 = scmp.ne.s32.totalorder %s115, %s116
      %p130 = scmp.eq.s32.totalorder %s19, 1
      %p131 = por %p129, %p130
      %p133 = scmp.ne.s32.totalorder %s116, %s132
      %p134 = scmp.eq.s32.totalorder %s19, 0
      %p135 = por %p133, %p134
      %p136 = scmp.le.s32.totalorder 1, %s13
      %p137 = scmp.lt.s32.totalorder %s13, 3
      %p138 = pnand %p136, %p137
      %p139 = pneg %p138
      // Predicated region
      $region9: #{tpu_custom_call.1} parent=5 // pred_check
        _
      $region10: #{tpu_custom_call.1} parent=5 // pred_check_branch
        %141 = sbr.rel (%p138) target = $region12
      $region11: #{tpu_custom_call.1} parent=5 // pred_region
        %s142 = ssub.s32 %s13, 1
        // Predicated region
        $region13: #{tpu_custom_call.1} parent=11 // pred_check
          %p143 = pneg %p46
        $region14: #{tpu_custom_call.1} parent=11 // pred_check_branch
          %145 = sbr.rel (%p143) target = $region16
        $region15: #{tpu_custom_call.1} parent=11 // pred_region
          %s147 = ssub.s32 16, 16
          %148 = vsyncadd [#allocation4], %s147
          %s150 = sshll.u32 %s0, 4
          %s151 = int_to_ptr.vmem [resolvable:$true] %s150
          %153 = dma.vmem_to_smem %s151, 16, [#allocation2], [#allocation4]
        $region16: #{tpu_custom_call.1} parent=11 // pred_fallthru
          _
      $region12: #{tpu_custom_call.1} parent=5 // pred_fallthru
        _
      %p154 = scmp.lt.s32.totalorder %s13, 2
      // Predicated region
      $region17: #{tpu_custom_call.1} parent=5 // pred_check
        %p155 = pneg %p154
      $region18: #{tpu_custom_call.1} parent=5 // pred_check_branch
        %157 = sbr.rel (%p155) target = $region20
      $region19: #{tpu_custom_call.1} parent=5 // pred_region
        // Predicated region
        $region21: #{tpu_custom_call.1} parent=19 // pred_check
          %p158 = pneg %p68
        $region22: #{tpu_custom_call.1} parent=19 // pred_check_branch
          %160 = sbr.rel (%p158) target = $region24
        $region23: #{tpu_custom_call.1} parent=19 // pred_region
          %s161 = smul.u32 2, %s21
          %p162 = scmp.lt.s32.totalorder %s20, 1
          %s163 = scalar_select %p162, %s20, 1
          %p164 = scmp.lt.s32.totalorder %s161, 1
          %s165 = scalar_select %p164, %s161, 1
          %s166 = smul.addr %s163, 2
          %s167 = sadd.s32 %s165, %s166
          %s168 = smul.addr %s167, 2
          %s169 = scalar_lea.vmem %s1, %s168
          %s170 = smul.u32 2, %s21
        $region24: #{tpu_custom_call.1} parent=19 // pred_fallthru
          _
        // Predicated region
        $region25: #{tpu_custom_call.1} parent=19 // pred_check
          %p171 = pneg %p94
        $region26: #{tpu_custom_call.1} parent=19 // pred_check_branch
          %173 = sbr.rel (%p171) target = $region28
        $region27: #{tpu_custom_call.1} parent=19 // pred_region
          %p174 = scmp.lt.s32.totalorder %s20, 1
          %s175 = scalar_select %p174, %s20, 1
          %s176 = smul.addr %s175, 8
          %s177 = smul.addr %s176, 8
          %s178 = scalar_lea.vmem %s2, %s177
        $region28: #{tpu_custom_call.1} parent=19 // pred_fallthru
          _
      $region20: #{tpu_custom_call.1} parent=5 // pred_fallthru
        _
      %p179 = scmp.le.s32.totalorder 1, %s13
      %p180 = scmp.lt.s32.totalorder %s13, 3
      %p181 = pnand %p179, %p180
      %p182 = pneg %p181
      // Predicated region
      $region29: #{tpu_custom_call.1} parent=5 // pred_check
        _
      $region30: #{tpu_custom_call.1} parent=5 // pred_check_branch
        %184 = sbr.rel (%p181) target = $region32
      $region31: #{tpu_custom_call.1} parent=5 // pred_region
        %s185 = ssub.s32 %s13, 1
        // Predicated region
        $region33: #{tpu_custom_call.1} parent=31 // pred_check
          %p186 = pneg %p46
        $region34: #{tpu_custom_call.1} parent=31 // pred_check_branch
          %188 = sbr.rel (%p186) target = $region36
        $region35: #{tpu_custom_call.1} parent=31 // pred_region
          %189 = dma.done [#allocation4], 16
        $region36: #{tpu_custom_call.1} parent=31 // pred_fallthru
          _
        %190 = sfence
        %p191 = pneg %p46
        %p192 = pneg %p43
        %s193 = smul.u32 2, %s23
        %p194 = scmp.lt.s32.totalorder %s22, 1
        %s195 = scalar_select %p194, %s22, 1
        %p196 = scmp.lt.s32.totalorder %s193, 1
        %s197 = scalar_select %p196, %s193, 1
        %s198 = smul.addr %s195, 2
        %s199 = sadd.s32 %s197, %s198
        %s200 = smul.addr %s199, 2
        %s201 = scalar_lea.vmem %s1, %s200
        %p202 = pneg %p74
        %p203 = pneg %p71
        %p204 = scmp.lt.s32.totalorder %s22, 1
        %s205 = scalar_select %p204, %s22, 1
        %s206 = smul.addr %s205, 8
        %s207 = smul.addr %s206, 8
        %s208 = scalar_lea.vmem %s2, %s207
        %p209 = pneg %p100
        %p210 = pneg %p97
        %p211 = pneg %p128
        %p212 = pneg %p125
        %s213 = sand.u32 %s115, 1
        %s214 = scalar_lea.sflag [#allocation3], %s213
        %s215 = sand.u32 %s115, 1
        %s216 = smul.addr %s215, 8
        %s217 = scalar_lea.vmem [#allocation5], %s216
        %s218 = smul.u32 2, %s23
        %p219 = scmp.lt.s32.totalorder %s22, 1
        %s220 = scalar_select %p219, %s22, 1
        %p221 = scmp.lt.s32.totalorder %s218, 1
        %s222 = scalar_select %p221, %s218, 1
        %s223 = smul.addr %s220, 2
        %s224 = sadd.s32 %s222, %s223
        %s225 = smul.addr %s224, 2
        %s226 = scalar_lea.vmem %s1, %s225
        %s227 = smul.u32 2, %s23
        %p228 = scmp.lt.s32.totalorder %s22, 1
        %s229 = scalar_select %p228, %s22, 1
        %s230 = smul.addr %s229, 8
        %s231 = smul.addr %s230, 8
        %s232 = scalar_lea.vmem %s2, %s231
        %s233 = smul.u32 2, %s23
        %s234 = smul.u32 %s22, 9
        %s235 = sld [smem:[#allocation2 + %s234]]
        %s236 = sadd.s32 %s234, 1
        %s237 = sld [smem:[#allocation2 + %s236]]
        %s238 = sadd.s32 %s234, 2
        %s239 = sld [smem:[#allocation2 + %s238]]
        %s240 = sadd.s32 %s234, 3
        %s241 = sld [smem:[#allocation2 + %s240]]
        %s242 = sadd.s32 %s234, 4
        %s243 = sld [smem:[#allocation2 + %s242]]
        %s244 = sadd.s32 %s234, 5
        %s245 = sld [smem:[#allocation2 + %s244]]
        %s246 = sadd.s32 %s234, 6
        %s247 = sld [smem:[#allocation2 + %s246]]
        %s248 = sadd.s32 %s234, 7
        %s249 = sld [smem:[#allocation2 + %s248]]
        %s250 = sadd.s32 %s234, 8
        %s251 = sld [smem:[#allocation2 + %s250]]
        %v252 = vld [vmem:[%s226] sm:$0xf]
        %v253 = vld [vmem:[%s232] sm:$0xff]
        %v254 = vld [vmem:[%s232 + $0x8] sm:$0xff]
        %v255 = vld [vmem:[%s232 + $0x10] sm:$0xff]
        %v256 = vld [vmem:[%s232 + $0x18] sm:$0xff]
        %v257 = vld [vmem:[%s232 + $0x20] sm:$0xff]
        %v258 = vld [vmem:[%s232 + $0x28] sm:$0xff]
        %v259 = vld [vmem:[%s232 + $0x30] sm:$0xff]
        %v260 = vld [vmem:[%s232 + $0x38] sm:$0xff]
        %v261 = vstv %s235
        %v262 = vmul.f32 %v261, %v252
        %v263 = vstv %s237
        %v264 = vmul.f32 %v263, %v252
        %v266 = vrot.slane %v264, 7
        %v267 = vrot.slane %v266, 2
        %v269 = vadd.f32 %v262, %v267
        %v270 = vstv %s239
        %v271 = vadd.f32 %v269, %v270
        %v272 = vstv %s241
        %v273 = vmul.f32 %v272, %v252
        %v274 = vstv %s243
        %v275 = vmul.f32 %v274, %v252
        %v277 = vrot.slane %v275, 7
        %v278 = vrot.slane %v277, 2
        %v280 = vadd.f32 %v273, %v278
        %v281 = vstv %s245
        %v282 = vadd.f32 %v280, %v281
        %v283 = vstv %s247
        %v284 = vmul.f32 %v283, %v252
        %v285 = vstv %s249
        %v286 = vmul.f32 %v285, %v252
        %v288 = vrot.slane %v286, 7
        %v289 = vrot.slane %v288, 2
        %v291 = vadd.f32 %v284, %v289
        %v292 = vstv %s251
        %v293 = vadd.f32 %v291, %v292
        %v294 = vand.u32 2147483647, %v293
        %vm295 = vcmp.gt.f32.partialorder %v294, 1e-08
        %v296 = vrcp.pop %v293
        %v297 = vmul.f32 1.0, %v296
        %v298 = vsel %vm295, %v297, 1.0
        %v299 = vmul.f32 %v271, %v298
        %v300 = vmul.f32 %v282, %v298
        %v301 = vadd.f32 %v299, 1.0
        %v302 = vmul.f32 %v301, 0.5
        %v303 = vmul.f32 %v302, 15.0
        %v304 = vadd.f32 %v300, 1.0
        %v305 = vmul.f32 %v304, 0.5
        %v306 = vmul.f32 %v305, 15.0
        %v307 = vfloor.f32 %v303
        %v308 = vadd.f32 %v307, 1.0
        %v309 = vfloor.f32 %v306
        %v310 = vadd.f32 %v309, 1.0
        %v311 = vsub.f32 %v303, %v307
        %v312 = vsub.f32 1.0, %v311
        %v313 = vsub.f32 %v306, %v309
        %v314 = vsub.f32 1.0, %v313
        %vm315 = vcmp.ge.f32.partialorder %v307, 0.0
        %vm316 = vcmp.le.f32.partialorder %v307, 15.0
        %vm317 = vmand %vm315, %vm316
        %v318 = vsel %vm317, %v312, 0.0
        %vm319 = vcmp.ge.f32.partialorder %v308, 0.0
        %vm320 = vcmp.le.f32.partialorder %v308, 15.0
        %vm321 = vmand %vm319, %vm320
        %v322 = vsel %vm321, %v311, 0.0
        %vm323 = vcmp.ge.f32.partialorder %v309, 0.0
        %vm324 = vcmp.le.f32.partialorder %v309, 15.0
        %vm325 = vmand %vm323, %vm324
        %v326 = vsel %vm325, %v314, 0.0
        %vm327 = vcmp.ge.f32.partialorder %v310, 0.0
        %vm328 = vcmp.le.f32.partialorder %v310, 15.0
        %vm329 = vmand %vm327, %vm328
        %v330 = vsel %vm329, %v313, 0.0
        %v331 = vmax.f32 %v307, 0.0
        %v332 = vmin.f32 %v331, 15.0
        %v333 = vcvt.f32.s32.to.zero.pseudo %v332
        %v334 = vmax.f32 %v308, 0.0
        %v335 = vmin.f32 %v334, 15.0
        %v336 = vcvt.f32.s32.to.zero.pseudo %v335
        %v337 = vmax.f32 %v309, 0.0
        %v338 = vmin.f32 %v337, 15.0
        %v339 = vcvt.f32.s32.to.zero.pseudo %v338
        %v340 = vmax.f32 %v310, 0.0
        %v341 = vmin.f32 %v340, 15.0
        %v342 = vcvt.f32.s32.to.zero.pseudo %v341
        %v343 = vlaneseq
        %v344 = vshrl.u32 %v343, 7
        %v345 = vadd.s32 %v344, 8
        %v346 = vlaneseq
        %v347 = vshrl.u32 %v346, 7
        %v348 = vsub.s32 0, %v347
        %v349 = vrot.slane %v333, %v348
        %v350 = vlaneseq
        %v351 = vshrl.u32 %v350, 7
        %v352 = vsub.s32 2, %v351
        %v353 = vrot.slane %v333, %v352
        %v354 = vlaneseq
        %v355 = vshrl.u32 %v354, 7
        %v356 = vsub.s32 0, %v355
        %v357 = vrot.slane %v349, %v356
        %v358 = vlaneseq
        %v359 = vshrl.u32 %v358, 7
        %v360 = vsub.s32 0, %v359
        %v361 = vrot.slane %v353, %v360
        %vm362 = vcmp.eq.s32.totalorder %v344, %v357
        %vm363 = vcmp.eq.s32.totalorder %v344, %v361
        %vm364 = vcmp.eq.s32.totalorder %v345, %v357
        %vm365 = vcmp.eq.s32.totalorder %v345, %v361
        %v367 = vlaneseq
        %v368 = vshrl.u32 %v367, 7
        %v369 = vsub.s32 0, %v368
        %v370 = vrot.slane %v318, %v369
        %v371 = vlaneseq
        %v372 = vshrl.u32 %v371, 7
        %v373 = vsub.s32 2, %v372
        %v374 = vrot.slane %v318, %v373
        %v377 = vlaneseq
        %v378 = vshrl.u32 %v377, 7
        %v379 = vsub.s32 0, %v378
        %v380 = vrot.slane %v370, %v379
        %v381 = vlaneseq
        %v382 = vshrl.u32 %v381, 7
        %v383 = vsub.s32 0, %v382
        %v384 = vrot.slane %v374, %v383
        %v385 = vsel %vm362, %v380, 0.0
        %v386 = vsel %vm363, %v384, 0.0
        %v387 = vsel %vm364, %v380, 0.0
        %v388 = vsel %vm365, %v384, 0.0
        %v389 = vlaneseq
        %v390 = vshrl.u32 %v389, 7
        %v391 = vsub.s32 0, %v390
        %v392 = vrot.slane %v336, %v391
        %v393 = vlaneseq
        %v394 = vshrl.u32 %v393, 7
        %v395 = vsub.s32 2, %v394
        %v396 = vrot.slane %v336, %v395
        %v397 = vlaneseq
        %v398 = vshrl.u32 %v397, 7
        %v399 = vsub.s32 0, %v398
        %v400 = vrot.slane %v392, %v399
        %v401 = vlaneseq
        %v402 = vshrl.u32 %v401, 7
        %v403 = vsub.s32 0, %v402
        %v404 = vrot.slane %v396, %v403
        %vm405 = vcmp.eq.s32.totalorder %v344, %v400
        %vm406 = vcmp.eq.s32.totalorder %v344, %v404
        %vm407 = vcmp.eq.s32.totalorder %v345, %v400
        %vm408 = vcmp.eq.s32.totalorder %v345, %v404
        %v410 = vlaneseq
        %v411 = vshrl.u32 %v410, 7
        %v412 = vsub.s32 0, %v411
        %v413 = vrot.slane %v322, %v412
        %v414 = vlaneseq
        %v415 = vshrl.u32 %v414, 7
        %v416 = vsub.s32 2, %v415
        %v417 = vrot.slane %v322, %v416
        %v420 = vlaneseq
        %v421 = vshrl.u32 %v420, 7
        %v422 = vsub.s32 0, %v421
        %v423 = vrot.slane %v413, %v422
        %v424 = vlaneseq
        %v425 = vshrl.u32 %v424, 7
        %v426 = vsub.s32 0, %v425
        %v427 = vrot.slane %v417, %v426
        %v428 = vsel %vm405, %v423, 0.0
        %v429 = vsel %vm406, %v427, 0.0
        %v430 = vsel %vm407, %v423, 0.0
        %v431 = vsel %vm408, %v427, 0.0
        %v432 = vadd.f32 %v385, %v428
        %v433 = vadd.f32 %v386, %v429
        %v434 = vadd.f32 %v387, %v430
        %v435 = vadd.f32 %v388, %v431
        %v436 = vlaneseq
        %v437 = vshrl.u32 %v436, 7
        %v438 = vsub.s32 0, %v437
        %v439 = vrot.slane %v339, %v438
        %v440 = vlaneseq
        %v441 = vshrl.u32 %v440, 7
        %v442 = vsub.s32 2, %v441
        %v443 = vrot.slane %v339, %v442
        %v444 = vlaneseq
        %v445 = vshrl.u32 %v444, 7
        %v446 = vsub.s32 0, %v445
        %v447 = vrot.slane %v439, %v446
        %v448 = vlaneseq
        %v449 = vshrl.u32 %v448, 7
        %v450 = vsub.s32 0, %v449
        %v451 = vrot.slane %v443, %v450
        %vm452 = vcmp.eq.s32.totalorder %v344, %v447
        %vm453 = vcmp.eq.s32.totalorder %v344, %v451
        %vm454 = vcmp.eq.s32.totalorder %v345, %v447
        %vm455 = vcmp.eq.s32.totalorder %v345, %v451
        %v457 = vlaneseq
        %v458 = vshrl.u32 %v457, 7
        %v459 = vsub.s32 0, %v458
        %v460 = vrot.slane %v326, %v459
        %v461 = vlaneseq
        %v462 = vshrl.u32 %v461, 7
        %v463 = vsub.s32 2, %v462
        %v464 = vrot.slane %v326, %v463
        %v467 = vlaneseq
        %v468 = vshrl.u32 %v467, 7
        %v469 = vsub.s32 0, %v468
        %v470 = vrot.slane %v460, %v469
        %v471 = vlaneseq
        %v472 = vshrl.u32 %v471, 7
        %v473 = vsub.s32 0, %v472
        %v474 = vrot.slane %v464, %v473
        %v475 = vsel %vm452, %v470, 0.0
        %v476 = vsel %vm453, %v474, 0.0
        %v477 = vsel %vm454, %v470, 0.0
        %v478 = vsel %vm455, %v474, 0.0
        %v479 = vlaneseq
        %v480 = vshrl.u32 %v479, 7
        %v481 = vsub.s32 0, %v480
        %v482 = vrot.slane %v342, %v481
        %v483 = vlaneseq
        %v484 = vshrl.u32 %v483, 7
        %v485 = vsub.s32 2, %v484
        %v486 = vrot.slane %v342, %v485
        %v487 = vlaneseq
        %v488 = vshrl.u32 %v487, 7
        %v489 = vsub.s32 0, %v488
        %v490 = vrot.slane %v482, %v489
        %v491 = vlaneseq
        %v492 = vshrl.u32 %v491, 7
        %v493 = vsub.s32 0, %v492
        %v494 = vrot.slane %v486, %v493
        %vm495 = vcmp.eq.s32.totalorder %v344, %v490
        %vm496 = vcmp.eq.s32.totalorder %v344, %v494
        %vm497 = vcmp.eq.s32.totalorder %v345, %v490
        %vm498 = vcmp.eq.s32.totalorder %v345, %v494
        %v500 = vlaneseq
        %v501 = vshrl.u32 %v500, 7
        %v502 = vsub.s32 0, %v501
        %v503 = vrot.slane %v330, %v502
        %v504 = vlaneseq
        %v505 = vshrl.u32 %v504, 7
        %v506 = vsub.s32 2, %v505
        %v507 = vrot.slane %v330, %v506
        %v510 = vlaneseq
        %v511 = vshrl.u32 %v510, 7
        %v512 = vsub.s32 0, %v511
        %v513 = vrot.slane %v503, %v512
        %v514 = vlaneseq
        %v515 = vshrl.u32 %v514, 7
        %v516 = vsub.s32 0, %v515
        %v517 = vrot.slane %v507, %v516
        %v518 = vsel %vm495, %v513, 0.0
        %v519 = vsel %vm496, %v517, 0.0
        %v520 = vsel %vm497, %v513, 0.0
        %v521 = vsel %vm498, %v517, 0.0
        %v522 = vadd.f32 %v475, %v518
        %v523 = vadd.f32 %v476, %v519
        %v524 = vadd.f32 %v477, %v520
        %v525 = vadd.f32 %v478, %v521
        %vm526 = vcmask 130048
        %v528 = vsel %vm526, %v253, 0
        %v531 = vsel %vm526, %v254, 0
        %v534 = vsel %vm526, %v255, 0
        %v537 = vsel %vm526, %v256, 0
        %v540 = vsel %vm526, %v257, 0
        %v543 = vsel %vm526, %v258, 0
        %v546 = vsel %vm526, %v259, 0
        %v549 = vsel %vm526, %v260, 0
        %551 = vmatprep.subr.mxu0 0.0
        %552 = vmatpush1.msra.mxu0 0.0
        %553 = vmatprep.subr.mxu0 0.0
        %554 = vmatpush1.msra.mxu0 0.0
        %555 = vmatprep.subr.mxu0 0.0
        %556 = vmatpush1.msra.mxu0 0.0
        %557 = vmatprep.subr.mxu0 0.0
        %558 = vmatpush1.msra.mxu0 0.0
        %559 = vmatprep.subr.mxu0 0.0
        %560 = vmatpush1.msra.mxu0 0.0
        %561 = vmatprep.subr.mxu0 0.0
        %562 = vmatpush1.msra.mxu0 0.0
        %563 = vmatprep.subr.mxu0 0.0
        %564 = vmatpush1.msra.mxu0 0.0
        %565 = vmatprep.subr.mxu0 0.0
        %566 = vmatpush1.msra.mxu0 0.0
        %567 = vmatprep.subr.mxu0 0.0
        %568 = vmatpush1.msra.mxu0 0.0
        %569 = vmatprep.subr.mxu0 0.0
        %570 = vmatpush1.msra.mxu0 0.0
        %571 = vmatprep.subr.mxu0 0.0
        %572 = vmatpush1.msra.mxu0 0.0
        %573 = vmatprep.subr.mxu0 0.0
        %574 = vmatpush1.msra.mxu0 0.0
        %575 = vmatprep.subr.mxu0 0.0
        %576 = vmatpush1.msra.mxu0 0.0
        %577 = vmatprep.subr.mxu0 0.0
        %578 = vmatpush1.msra.mxu0 0.0
        %579 = vmatprep.subr.mxu0 %v435
        %580 = vmatpush1.msra.mxu0 %v434
        %581 = vmatprep.subr.mxu0 %v433
        %582 = vmatpush1.msra.mxu0 %v432
        %583 = vmatprep.subr.mxu0 0.0
        %584 = vmatpush2.msra.mxu0 0.0
        %585 = vmatprep.subr.mxu0 0.0
        %586 = vmatpush2.msra.mxu0 0.0
        %587 = vmatprep.subr.mxu0 0.0
        %588 = vmatpush2.msra.mxu0 0.0
        %589 = vmatprep.subr.mxu0 0.0
        %590 = vmatpush2.msra.mxu0 0.0
        %591 = vmatprep.subr.mxu0 0.0
        %592 = vmatpush2.msra.mxu0 0.0
        %593 = vmatprep.subr.mxu0 0.0
        %594 = vmatpush2.msra.mxu0 0.0
        %595 = vmatprep.subr.mxu0 0.0
        %596 = vmatpush2.msra.mxu0 0.0
        %597 = vmatprep.subr.mxu0 0.0
        %598 = vmatpush2.msra.mxu0 0.0
        %599 = vmatprep.subr.mxu0 0.0
        %600 = vmatpush2.msra.mxu0 0.0
        %601 = vmatprep.subr.mxu0 0.0
        %602 = vmatpush2.msra.mxu0 0.0
        %603 = vmatprep.subr.mxu0 0.0
        %604 = vmatpush2.msra.mxu0 0.0
        %605 = vmatprep.subr.mxu0 0.0
        %606 = vmatpush2.msra.mxu0 0.0
        %607 = vmatprep.subr.mxu0 0.0
        %608 = vmatpush2.msra.mxu0 0.0
        %609 = vmatprep.subr.mxu0 0.0
        %610 = vmatpush2.msra.mxu0 0.0
        %611 = vmatprep.subr.mxu0 0.0
        %612 = vmatpush2.msra.mxu0 0.0
        %613 = vmatprep.subr.mxu0 0.0
        %614 = vmatpush2.msra.mxu0 0.0
        %615 = vmatprep.mubr.f32.mxu0 0.0
        %616 = vmatmul.mubr.f32.gmra.mxu0 %v528
        %v617 = vpop.f32.mrf.mxu0
        %v618 = vadd.f32 0.0, %v617
        %v619 = vpop.f32.mrf.mxu0
        %v620 = vadd.f32 0.0, %v619
        %621 = vmatprep.mubr.f32.mxu0 0.0
        %622 = vmatmul.mubr.f32.gmra.mxu0 %v531
        %v623 = vpop.f32.mrf.mxu0
        %v624 = vadd.f32 0.0, %v623
        %v625 = vpop.f32.mrf.mxu0
        %v626 = vadd.f32 0.0, %v625
        %627 = vmatprep.mubr.f32.mxu0 0.0
        %628 = vmatmul.mubr.f32.gmra.mxu0 %v534
        %v629 = vpop.f32.mrf.mxu0
        %v630 = vadd.f32 0.0, %v629
        %v631 = vpop.f32.mrf.mxu0
        %v632 = vadd.f32 0.0, %v631
        %633 = vmatprep.mubr.f32.mxu0 0.0
        %634 = vmatmul.mubr.f32.gmra.mxu0 %v537
        %v635 = vpop.f32.mrf.mxu0
        %v636 = vadd.f32 0.0, %v635
        %v637 = vpop.f32.mrf.mxu0
        %v638 = vadd.f32 0.0, %v637
        %639 = vmatprep.mubr.f32.mxu0 0.0
        %640 = vmatmul.mubr.f32.gmra.mxu0 %v540
        %v641 = vpop.f32.mrf.mxu0
        %v642 = vadd.f32 0.0, %v641
        %v643 = vpop.f32.mrf.mxu0
        %v644 = vadd.f32 0.0, %v643
        %645 = vmatprep.mubr.f32.mxu0 0.0
        %646 = vmatmul.mubr.f32.gmra.mxu0 %v543
        %v647 = vpop.f32.mrf.mxu0
        %v648 = vadd.f32 0.0, %v647
        %v649 = vpop.f32.mrf.mxu0
        %v650 = vadd.f32 0.0, %v649
        %651 = vmatprep.mubr.f32.mxu0 0.0
        %652 = vmatmul.mubr.f32.gmra.mxu0 %v546
        %v653 = vpop.f32.mrf.mxu0
        %v654 = vadd.f32 0.0, %v653
        %v655 = vpop.f32.mrf.mxu0
        %v656 = vadd.f32 0.0, %v655
        %657 = vmatprep.mubr.f32.mxu0 0.0
        %658 = vmatmul.mubr.f32.gmra.mxu0 %v549
        %v659 = vpop.f32.mrf.mxu0
        %v660 = vadd.f32 0.0, %v659
        %v661 = vpop.f32.mrf.mxu0
        %v662 = vadd.f32 0.0, %v661
        %663 = vdwg.mxu0
        %v664 = vmul.f32 %v618, %v522
        %v665 = vmul.f32 %v620, %v523
        %v666 = vmul.f32 %v624, %v524
        %v667 = vmul.f32 %v626, %v525
        %v668 = vmul.f32 %v630, %v522
        %v669 = vmul.f32 %v632, %v523
        %v670 = vmul.f32 %v636, %v524
        %v671 = vmul.f32 %v638, %v525
        %v672 = vmul.f32 %v642, %v522
        %v673 = vmul.f32 %v644, %v523
        %v674 = vmul.f32 %v648, %v524
        %v675 = vmul.f32 %v650, %v525
        %v676 = vmul.f32 %v654, %v522
        %v677 = vmul.f32 %v656, %v523
        %v678 = vmul.f32 %v660, %v524
        %v679 = vmul.f32 %v662, %v525
        %v680 = vadd.f32 %v664, %v666
        %v681 = vrot.slane %v680, 4
        %v682 = vadd.f32 %v680, %v681
        %v683 = vrot.slane %v682, 2
        %v684 = vadd.f32 %v682, %v683
        %v685 = vrot.slane %v684, 1
        %v686 = vadd.f32 %v684, %v685
        %v687 = vadd.f32 %v665, %v667
        %v688 = vrot.slane %v687, 4
        %v689 = vadd.f32 %v687, %v688
        %v690 = vrot.slane %v689, 2
        %v691 = vadd.f32 %v689, %v690
        %v692 = vrot.slane %v691, 1
        %v693 = vadd.f32 %v691, %v692
        %v694 = vadd.f32 %v668, %v670
        %v695 = vrot.slane %v694, 4
        %v696 = vadd.f32 %v694, %v695
        %v697 = vrot.slane %v696, 2
        %v698 = vadd.f32 %v696, %v697
        %v699 = vrot.slane %v698, 1
        %v700 = vadd.f32 %v698, %v699
        %v701 = vadd.f32 %v669, %v671
        %v702 = vrot.slane %v701, 4
        %v703 = vadd.f32 %v701, %v702
        %v704 = vrot.slane %v703, 2
        %v705 = vadd.f32 %v703, %v704
        %v706 = vrot.slane %v705, 1
        %v707 = vadd.f32 %v705, %v706
        %v708 = vadd.f32 %v672, %v674
        %v709 = vrot.slane %v708, 4
        %v710 = vadd.f32 %v708, %v709
        %v711 = vrot.slane %v710, 2
        %v712 = vadd.f32 %v710, %v711
        %v713 = vrot.slane %v712, 1
        %v714 = vadd.f32 %v712, %v713
        %v715 = vadd.f32 %v673, %v675
        %v716 = vrot.slane %v715, 4
        %v717 = vadd.f32 %v715, %v716
        %v718 = vrot.slane %v717, 2
        %v719 = vadd.f32 %v717, %v718
        %v720 = vrot.slane %v719, 1
        %v721 = vadd.f32 %v719, %v720
        %v722 = vadd.f32 %v676, %v678
        %v723 = vrot.slane %v722, 4
        %v724 = vadd.f32 %v722, %v723
        %v725 = vrot.slane %v724, 2
        %v726 = vadd.f32 %v724, %v725
        %v727 = vrot.slane %v726, 1
        %v728 = vadd.f32 %v726, %v727
        %v729 = vadd.f32 %v677, %v679
        %v730 = vrot.slane %v729, 4
        %v731 = vadd.f32 %v729, %v730
        %v732 = vrot.slane %v731, 2
        %v733 = vadd.f32 %v731, %v732
        %v734 = vrot.slane %v733, 1
        %v735 = vadd.f32 %v733, %v734
        %v744 = vcombine.low %v686, %v693
        %v745 = vcombine.low %v700, %v707
        %v746 = vcombine.low %v714, %v721
        %v747 = vcombine.low %v728, %v735
        %v748 = vrot.slane %v745, 7
        %vm749 = vcmask 1041409
        %v750 = vsel %vm749, %v748, %v744
        %vm751 = vcmask 1045509
        %v752 = vsel %vm751, %v748, %v750
        %v753 = vrot.slane %v746, 6
        %vm754 = vcmask 1042434
        %v755 = vsel %vm754, %v753, %v752
        %vm756 = vcmask 1046534
        %v757 = vsel %vm756, %v753, %v755
        %v758 = vrot.slane %v747, 5
        %vm759 = vcmask 1043459
        %v760 = vsel %vm759, %v758, %v757
        %vm761 = vcmask 1047559
        %v762 = vsel %vm761, %v758, %v760
        %764 = vst [vmem:[%s217] sm:$0xff] %v762
        %s765 = sand.u32 %s115, 1
        %s766 = scalar_lea.sflag [#allocation3], %s765
        %s767 = sand.u32 %s115, 1
        %s768 = smul.addr %s767, 8
        %s769 = scalar_lea.vmem [#allocation5], %s768
        // Predicated region
        $region37: #{tpu_custom_call.1} parent=31 // pred_check
          %p770 = pneg %p125
        $region38: #{tpu_custom_call.1} parent=31 // pred_check_branch
          %772 = sbr.rel (%p770) target = $region40
        $region39: #{tpu_custom_call.1} parent=31 // pred_region
          %s773 = smul.u32 2, %s23
          %s775 = ssub.s32 128, 128
          %776 = vsyncadd %s766, %s775
          %s777 = smul.addr %s22, 2
          %s778 = sadd.s32 %s773, %s777
          %s779 = smul.addr %s778, 64
          %s780 = scalar_lea.hbm %s3, %s779
          %s782 = sshll.u32 %s769, 4
          %s783 = int_to_ptr.vmem [resolvable:$true] %s782
          %785 = dma.vmem_to_hbm [thread:$0]  %s783, 128, %s780, %s766
        $region40: #{tpu_custom_call.1} parent=31 // pred_fallthru
          _
      $region32: #{tpu_custom_call.1} parent=5 // pred_fallthru
        _
      %p786 = scmp.le.s32.totalorder 2, %s13
      // Predicated region
      $region41: #{tpu_custom_call.1} parent=5 // pred_check
        %p787 = pneg %p786
      $region42: #{tpu_custom_call.1} parent=5 // pred_check_branch
        %789 = sbr.rel (%p787) target = $region44
      $region43: #{tpu_custom_call.1} parent=5 // pred_region
        %s790 = ssub.s32 %s13, 2
        // Predicated region
        $region45: #{tpu_custom_call.1} parent=43 // pred_check
          %p791 = pneg %p131
        $region46: #{tpu_custom_call.1} parent=43 // pred_check_branch
          %793 = sbr.rel (%p791) target = $region48
        $region47: #{tpu_custom_call.1} parent=43 // pred_region
          %s794 = sand.u32 %s116, 1
          %s795 = scalar_lea.sflag [#allocation3], %s794
          %s796 = sand.u32 %s116, 1
          %s797 = smul.addr %s796, 8
          %s798 = scalar_lea.vmem [#allocation5], %s797
          %799 = dma.done %s795, 128
        $region48: #{tpu_custom_call.1} parent=43 // pred_fallthru
          _
      $region44: #{tpu_custom_call.1} parent=5 // pred_fallthru
        _
    $region6: #{tpu_custom_call.1} parent=1 // loop_footer
      %s17 = sadd.s32 1, %s13
    $region7: #{tpu_custom_call.1} parent=1 // loop_footer_branch
      %12 = sbr.rel target = $region3
    $region8: #{tpu_custom_call.1} parent=1 // loop_exit
      _
    %800 = vsyncpa [#allocation3], 1
    %s801 = scalar_lea.sflag [#allocation3], 1
    %802 = vsyncpa %s801, 1
    %803 = vsyncpa [#allocation4], 1
    %s804 = scalar_lea.sflag [#allocation4], 1
    %805 = vsyncpa %s804, 1

</llo_original>
